<compile_context>
chip_gen: v7x
topology: tpu7x:2x2x1
jax: 0.10.0
libtpu: 0.0.40
codegen_flags: <defaults>
</compile_context>

<pallas_src>
import functools
import math

import jax
import jax.numpy as jnp
import numpy as np
from jax.experimental import pallas as pl
from jax.experimental.pallas import tpu as pltpu


def _round_up(v, m):
    return ((v + m - 1) // m) * m


def _pick_latent_chunk(latent_dim, cap=2048):
    """Latent-chunk size: full L when small, else a 128-multiple divisor."""
    if latent_dim <= cap:
        return latent_dim
    for c in (2048, 1024, 512, 256, 128):
        if latent_dim % c == 0:
            return c
    return latent_dim  # odd L: keep whole latent dim resident


def _nbytes(shape, dtype):
    return int(np.prod(shape)) * np.dtype(dtype).itemsize


def _topk_sae_kernel(x_ref, wet_ref, be_ref, wdt_ref, bd_ref,
                     xr_ref, zs_ref,
                     z_vmem, thr_vmem, acc_vmem,
                     *, k, num_l, tl):
    """Two-pass SAE forward over latent chunks for one batch tile.

    Grid axis 1 has 2*num_l steps: steps [0, num_l) run the encoder chunk,
    steps [num_l, 2*num_l) run relu+decoder chunk; the top-k threshold is
    computed once at step num_l.
    """
    jj = pl.program_id(1)

    # ---- Pass 0: encoder matmul for one latent chunk -> z scratch --------
    @pl.when(jj < num_l)
    def _encode():
        zc = jnp.dot(x_ref[...], wet_ref[...],
                     preferred_element_type=jnp.float32)      # [TB, tL] f32
        zc = zc + be_ref[...].astype(jnp.float32)
        if num_l == 1:
            z_vmem[...] = zc
        else:
            start = pl.multiple_of(jj * tl, tl)
            z_vmem[:, pl.ds(start, tl)] = zc

    # ---- Boundary: per-row k-th largest value (torch.topk semantics) -----
    @pl.when(jj == num_l)
    def _threshold():
        z = z_vmem[...]                                        # [TB, L] f32
        b, l = z.shape
        col = jax.lax.broadcasted_iota(jnp.int32, (b, l), 1)
        masked = z
        thr = jnp.full((b, 1), -jnp.inf, dtype=jnp.float32)
        # k is a small compile-time constant -> fully unrolled so the LLO
        # scheduler can interleave the XLU reduces with MXU work.
        for _ in range(k):
            m = jnp.max(masked, axis=-1, keepdims=True)        # [TB, 1]
            is_max = masked == m
            first = jnp.min(jnp.where(is_max, col, l),
                            axis=-1, keepdims=True)            # first max col
            masked = jnp.where(col == first, -jnp.inf, masked)  # knock out one
            thr = m
        thr_vmem[...] = thr
        acc_vmem[...] = jnp.zeros_like(acc_vmem)

    # ---- Pass 1: relu(z - thr) chunk -> z_sparse out, decoder accumulate --
    @pl.when(jj >= num_l)
    def _decode():
        if num_l == 1:
            zc = z_vmem[...]
        else:
            start = pl.multiple_of((jj - num_l) * tl, tl)
            zc = z_vmem[:, pl.ds(start, tl)]
        zs = jnp.maximum(zc - thr_vmem[...], 0.0)              # [TB, tL] f32
        zs_ref[...] = zs.astype(zs_ref.dtype)
        # Keep the MXU at the weights' native rate (bf16 stays bf16).
        zs_mm = zs if wdt_ref.dtype == jnp.float32 else zs.astype(wdt_ref.dtype)
        acc_vmem[...] += jnp.dot(zs_mm, wdt_ref[...],
                                 preferred_element_type=jnp.float32)

    @pl.when(jj == 2 * num_l - 1)
    def _finalize():
        xr = acc_vmem[...] + bd_ref[...].astype(jnp.float32)
        xr_ref[...] = xr.astype(xr_ref.dtype)


def topk_sae_forward(x, w_enc_t, b_enc, w_dec_t, b_dec, k):
    """x: [B, D]; w_enc_t: [D, L] (= W_enc.T, stored pre-transposed);
    b_enc: [L]; w_dec_t: [L, D] (= W_dec.T); b_dec: [D]."""
    B, D = x.shape
    Dw, L = w_enc_t.shape
    assert Dw == D and w_dec_t.shape == (L, D)
    assert b_enc.shape == (L,) and b_dec.shape == (D,)
    assert 1 <= k <= L

    # ---- batch tiling (pad rows so the batch grid divides evenly) --------
    if B <= 256:
        TB = _round_up(B, 8)
        B_pad = TB
    else:
        TB = 256                     # fills a 256-wide MXU pass (v6e/v7x)
        B_pad = _round_up(B, TB)
    if B_pad != B:
        x = jnp.pad(x, ((0, B_pad - B), (0, 0)))
    nb = B_pad // TB

    # ---- latent tiling ----------------------------------------------------
    tl = _pick_latent_chunk(L)
    num_l = L // tl

    be = b_enc.reshape(1, L)
    bd = b_dec.reshape(1, D)

    kernel = functools.partial(_topk_sae_kernel, k=k, num_l=num_l, tl=tl)

    # ---- explicit VMEM budget (double-buffered blocks + resident scratch) -
    scratch_bytes = (_nbytes((TB, L), jnp.float32)
                     + _nbytes((TB, 128), jnp.float32)
                     + _nbytes((TB, max(D, 128)), jnp.float32))
    block_bytes = (_nbytes((TB, D), x.dtype)
                   + _nbytes((D, tl), w_enc_t.dtype)
                   + _nbytes((1, tl), be.dtype)
                   + _nbytes((tl, D), w_dec_t.dtype)
                   + _nbytes((1, D), bd.dtype)
                   + _nbytes((TB, D), x.dtype)
                   + _nbytes((TB, tl), x.dtype))
    # Cap at 64 MiB so the same tiling stays valid on v7x's smaller VMEM.
    vmem_limit = int(min(max(2 * block_bytes + scratch_bytes + (2 << 20),
                             32 * 1024 * 1024),
                         64 * 1024 * 1024))

    grid_spec = pltpu.PrefetchScalarGridSpec(
        num_scalar_prefetch=0,
        grid=(nb, 2 * num_l),
        in_specs=[
            # x row block: resident across the latent/pass axis.
            pl.BlockSpec((TB, D), lambda i, j: (i, 0)),
            # W_enc.T chunk: streamed in pass 0, pinned to the last chunk after.
            pl.BlockSpec((D, tl), lambda i, j: (0, jnp.minimum(j, num_l - 1))),
            pl.BlockSpec((1, tl), lambda i, j: (0, jnp.minimum(j, num_l - 1))),
            # W_dec.T chunk: pinned to chunk 0 during pass 0, streamed in pass 1.
            pl.BlockSpec((tl, D), lambda i, j: (jnp.maximum(j - num_l, 0), 0)),
            pl.BlockSpec((1, D), lambda i, j: (0, 0)),
        ],
        out_specs=(
            # x_recon: one block per batch tile, written at the last step.
            pl.BlockSpec((TB, D), lambda i, j: (i, 0)),
            # z_sparse: written chunkwise during pass 1.
            pl.BlockSpec((TB, tl), lambda i, j: (i, jnp.maximum(j - num_l, 0))),
        ),
        scratch_shapes=[
            pltpu.VMEM((TB, L), jnp.float32),   # full latent row block z
            pltpu.VMEM((TB, 1), jnp.float32),   # per-row top-k threshold
            pltpu.VMEM((TB, D), jnp.float32),   # x_recon f32 accumulator
        ],
    )

    x_recon, z_sparse = pl.pallas_call(
        kernel,
        out_shape=(jax.ShapeDtypeStruct((B_pad, D), x.dtype),   # x_recon
                   jax.ShapeDtypeStruct((B_pad, L), x.dtype)),  # z_sparse
        grid_spec=grid_spec,
        compiler_params=pltpu.CompilerParams(
            dimension_semantics=("parallel", "arbitrary"),
            vmem_limit_bytes=vmem_limit,
        ),
    )(x, w_enc_t, be, w_dec_t, bd)

    if B_pad != B:
        x_recon = x_recon[:B]
        z_sparse = z_sparse[:B]
    return x_recon, z_sparse


if __name__ == "__main__":
    # Small shapes consistent with the module: x is [batch, input_dim].
    B, D_IN, LATENT = 8, 32, 64
    K = max(1, int(0.05 * LATENT))  # k_ratio default -> top-3

    key = jax.random.PRNGKey(0)
    kx, kwe, kwd = jax.random.split(key, 3)

    x = jax.random.normal(kx, (B, D_IN), dtype=jnp.float32)

    # Deterministic parameter init mirroring _init_dictionary("uniform"):
    #   encoder: kaiming_uniform(nonlinearity='relu')   -> bound = sqrt(6/fan_in)
    #   decoder: kaiming_uniform(nonlinearity='linear') -> bound = sqrt(3/fan_in)
    #   biases zero.
    enc_bound = math.sqrt(6.0 / D_IN)
    dec_bound = math.sqrt(3.0 / LATENT)
    enc_w = jax.random.uniform(kwe, (LATENT, D_IN), jnp.float32, -enc_bound, enc_bound)
    dec_w = jax.random.uniform(kwd, (D_IN, LATENT), jnp.float32, -dec_bound, dec_bound)
    enc_b = jnp.zeros((LATENT,), jnp.float32)
    dec_b = jnp.zeros((D_IN,), jnp.float32)

    # Store the weights pre-transposed ONCE (MXU-friendly [K, N] layout);
    # the forward itself never transposes per call.
    w_enc_t = jnp.asarray(enc_w.T)     # [D, L]
    w_dec_t = jnp.asarray(dec_w.T)     # [L, D]

    x_recon, z_sparse = topk_sae_forward(x, w_enc_t, enc_b, w_dec_t, dec_b, K)
    jax.block_until_ready((x_recon, z_sparse))

    # Pure-JAX reference (same semantics as the PyTorch forward).
    z_full = x @ enc_w.T + enc_b
    vals, _ = jax.lax.top_k(z_full, K)
    thr = vals[:, -1:]
    zs_ref = jnp.maximum(z_full - thr, 0.0)
    xr_ref = zs_ref @ dec_w.T + dec_b

    assert jnp.allclose(z_sparse, zs_ref, atol=1e-5, rtol=1e-5), "latent mismatch"
    assert jnp.allclose(x_recon, xr_ref, atol=1e-5, rtol=1e-5), "recon mismatch"
    # At most K-1 strictly-positive entries per row (k-th value zeroes itself).
    assert int(jnp.max(jnp.sum(z_sparse > 0, axis=1))) <= K

    print("KERNEL_OK")
</pallas_src>

<mosaic_0001>
module attributes {stable_mosaic.version = 11 : i64} {
  func.func @_topk_sae_kernel(%arg0: i32, %arg1: i32, %arg2: memref<8x32xf32, #tpu.memory_space<vmem>>, %arg3: memref<32x64xf32, #tpu.memory_space<vmem>>, %arg4: memref<1x64xf32, #tpu.memory_space<vmem>>, %arg5: memref<64x32xf32, #tpu.memory_space<vmem>>, %arg6: memref<1x32xf32, #tpu.memory_space<vmem>>, %arg7: memref<8x32xf32, #tpu.memory_space<vmem>>, %arg8: memref<8x64xf32, #tpu.memory_space<vmem>>, %arg9: memref<8x64xf32, #tpu.memory_space<vmem>>, %arg10: memref<8x1xf32, #tpu.memory_space<vmem>>, %arg11: memref<8x32xf32, #tpu.memory_space<vmem>>) attributes {dimension_semantics = [#tpu.dimension_semantics<parallel>, #tpu.dimension_semantics<arbitrary>], iteration_bounds = array<i64: 1, 2>, scalar_prefetch = 0 : i64, scratch_operands = 3 : i64, tpu.core_type = #tpu.core_type<tc>, window_params = [{transform_indices = @transform_0, window_bounds = array<i64: 8, 32>}, {transform_indices = @transform_1, window_bounds = array<i64: 32, 64>}, {transform_indices = @transform_2, window_bounds = array<i64: 1, 64>}, {transform_indices = @transform_3, window_bounds = array<i64: 64, 32>}, {pipeline_mode = #tpu.pipeline_mode<synchronous>, transform_indices = @transform_4, window_bounds = array<i64: 1, 32>}, {transform_indices = @transform_5, window_bounds = array<i64: 8, 32>}, {transform_indices = @transform_6, window_bounds = array<i64: 8, 64>}]} {
    %c1_i32 = arith.constant 1 : i32
    %0 = arith.cmpi slt, %arg1, %c1_i32 : i32
    %1 = arith.extui %0 : i1 to i32
    %c0_i32 = arith.constant 0 : i32
    %2 = arith.cmpi ne, %1, %c0_i32 : i32
    scf.if %2 {
      %c0 = arith.constant 0 : index
      %c0_6 = arith.constant 0 : index
      %12 = vector.load %arg2[%c0, %c0_6] : memref<8x32xf32, #tpu.memory_space<vmem>>, vector<8x32xf32>
      %c0_7 = arith.constant 0 : index
      %c0_8 = arith.constant 0 : index
      %13 = vector.load %arg3[%c0_7, %c0_8] : memref<32x64xf32, #tpu.memory_space<vmem>>, vector<32x64xf32>
      %cst = arith.constant dense<0.000000e+00> : vector<8x64xf32>
      %14 = tpu.matmul %12, %13, %cst {dimension_numbers = #tpu.dot_dimension_numbers<[1], [0], [0], [1], [0, 0, 1, 1], [], []>} : vector<8x32xf32>, vector<32x64xf32>, vector<8x64xf32> -> vector<8x64xf32>
      %c0_9 = arith.constant 0 : index
      %c0_10 = arith.constant 0 : index
      %15 = vector.load %arg4[%c0_9, %c0_10] : memref<1x64xf32, #tpu.memory_space<vmem>>, vector<1x64xf32>
      %16 = vector.broadcast %15 : vector<1x64xf32> to vector<8x64xf32>
      %17 = arith.addf %14, %16 : vector<8x64xf32>
      %c0_11 = arith.constant 0 : index
      %c0_12 = arith.constant 0 : index
      %18 = vector.load %arg9[%c0_11, %c0_12] : memref<8x64xf32, #tpu.memory_space<vmem>>, vector<8x64xf32>
      tpu.vector_store %arg9[%c0_11, %c0_12], %17 {strides = array<i32>} : memref<8x64xf32, #tpu.memory_space<vmem>>, vector<8x64xf32>,
    } else {
    }
    %c1_i32_0 = arith.constant 1 : i32
    %3 = arith.cmpi eq, %arg1, %c1_i32_0 : i32
    %4 = arith.extui %3 : i1 to i32
    %c0_i32_1 = arith.constant 0 : i32
    %5 = arith.cmpi ne, %4, %c0_i32_1 : i32
    scf.if %5 {
      %c0 = arith.constant 0 : index
      %c0_6 = arith.constant 0 : index
      %12 = vector.load %arg9[%c0, %c0_6] : memref<8x64xf32, #tpu.memory_space<vmem>>, vector<8x64xf32>
      %13 = tpu.iota {dimensions = array<i32: 1>} : vector<8x64xi32>
      %cst = arith.constant dense<0xFF800000> : vector<8xf32>
      %14 = vector.multi_reduction <maximumf>, %12, %cst [1] : vector<8x64xf32> to vector<8xf32>
      %15 = vector.shape_cast %14 : vector<8xf32> to vector<8x1xf32>
      %16 = vector.broadcast %15 : vector<8x1xf32> to vector<8x64xf32>
      %17 = arith.cmpf oeq, %12, %16 : vector<8x64xf32>
      %c64_i32 = arith.constant 64 : i32
      %18 = vector.broadcast %c64_i32 : i32 to vector<8x64xi32>
      %19 = arith.select %17, %13, %18 : vector<8x64xi1>, vector<8x64xi32>
      %cst_7 = arith.constant dense<2147483647> : vector<8xi32>
      %20 = vector.multi_reduction <minsi>, %19, %cst_7 [1] : vector<8x64xi32> to vector<8xi32>
      %21 = vector.shape_cast %20 : vector<8xi32> to vector<8x1xi32>
      %22 = vector.broadcast %21 : vector<8x1xi32> to vector<8x64xi32>
      %23 = arith.cmpi eq, %13, %22 : vector<8x64xi32>
      %cst_8 = arith.constant 0xFF800000 : f32
      %24 = vector.broadcast %cst_8 : f32 to vector<8x64xf32>
      %25 = arith.select %23, %24, %12 : vector<8x64xi1>, vector<8x64xf32>
      %cst_9 = arith.constant dense<0xFF800000> : vector<8xf32>
      %26 = vector.multi_reduction <maximumf>, %25, %cst_9 [1] : vector<8x64xf32> to vector<8xf32>
      %27 = vector.shape_cast %26 : vector<8xf32> to vector<8x1xf32>
      %28 = vector.broadcast %27 : vector<8x1xf32> to vector<8x64xf32>
      %29 = arith.cmpf oeq, %25, %28 : vector<8x64xf32>
      %c64_i32_10 = arith.constant 64 : i32
      %30 = vector.broadcast %c64_i32_10 : i32 to vector<8x64xi32>
      %31 = arith.select %29, %13, %30 : vector<8x64xi1>, vector<8x64xi32>
      %cst_11 = arith.constant dense<2147483647> : vector<8xi32>
      %32 = vector.multi_reduction <minsi>, %31, %cst_11 [1] : vector<8x64xi32> to vector<8xi32>
      %33 = vector.shape_cast %32 : vector<8xi32> to vector<8x1xi32>
      %34 = vector.broadcast %33 : vector<8x1xi32> to vector<8x64xi32>
      %35 = arith.cmpi eq, %13, %34 : vector<8x64xi32>
      %cst_12 = arith.constant 0xFF800000 : f32
      %36 = vector.broadcast %cst_12 : f32 to vector<8x64xf32>
      %37 = arith.select %35, %36, %25 : vector<8x64xi1>, vector<8x64xf32>
      %cst_13 = arith.constant dense<0xFF800000> : vector<8xf32>
      %38 = vector.multi_reduction <maximumf>, %37, %cst_13 [1] : vector<8x64xf32> to vector<8xf32>
      %39 = vector.shape_cast %38 : vector<8xf32> to vector<8x1xf32>
      %c0_14 = arith.constant 0 : index
      %c0_15 = arith.constant 0 : index
      %40 = vector.load %arg10[%c0_14, %c0_15] : memref<8x1xf32, #tpu.memory_space<vmem>>, vector<8x1xf32>
      tpu.vector_store %arg10[%c0_14, %c0_15], %39 {strides = array<i32>} : memref<8x1xf32, #tpu.memory_space<vmem>>, vector<8x1xf32>,
      %cst_16 = arith.constant 0.000000e+00 : f32
      %41 = vector.broadcast %cst_16 : f32 to vector<8x32xf32>
      %c0_17 = arith.constant 0 : index
      %c0_18 = arith.constant 0 : index
      %42 = vector.load %arg11[%c0_17, %c0_18] : memref<8x32xf32, #tpu.memory_space<vmem>>, vector<8x32xf32>
      tpu.vector_store %arg11[%c0_17, %c0_18], %41 {strides = array<i32>} : memref<8x32xf32, #tpu.memory_space<vmem>>, vector<8x32xf32>,
    } else {
    }
    %c1_i32_2 = arith.constant 1 : i32
    %6 = arith.cmpi sge, %arg1, %c1_i32_2 : i32
    %7 = arith.extui %6 : i1 to i32
    %c0_i32_3 = arith.constant 0 : i32
    %8 = arith.cmpi ne, %7, %c0_i32_3 : i32
    scf.if %8 {
      %c0 = arith.constant 0 : index
      %c0_6 = arith.constant 0 : index
      %12 = vector.load %arg9[%c0, %c0_6] : memref<8x64xf32, #tpu.memory_space<vmem>>, vector<8x64xf32>
      %c0_7 = arith.constant 0 : index
      %c0_8 = arith.constant 0 : index
      %13 = vector.load %arg10[%c0_7, %c0_8] : memref<8x1xf32, #tpu.memory_space<vmem>>, vector<8x1xf32>
      %14 = vector.broadcast %13 : vector<8x1xf32> to vector<8x64xf32>
      %15 = arith.subf %12, %14 : vector<8x64xf32>
      %cst = arith.constant 0.000000e+00 : f32
      %16 = vector.broadcast %cst : f32 to vector<8x64xf32>
      %17 = arith.maximumf %15, %16 : vector<8x64xf32>
      %c0_9 = arith.constant 0 : index
      %c0_10 = arith.constant 0 : index
      %18 = vector.load %arg8[%c0_9, %c0_10] : memref<8x64xf32, #tpu.memory_space<vmem>>, vector<8x64xf32>
      tpu.vector_store %arg8[%c0_9, %c0_10], %17 {strides = array<i32>} : memref<8x64xf32, #tpu.memory_space<vmem>>, vector<8x64xf32>,
      %c0_11 = arith.constant 0 : index
      %c0_12 = arith.constant 0 : index
      %19 = vector.load %arg11[%c0_11, %c0_12] : memref<8x32xf32, #tpu.memory_space<vmem>>, vector<8x32xf32>
      %c0_13 = arith.constant 0 : index
      %c0_14 = arith.constant 0 : index
      %20 = vector.load %arg5[%c0_13, %c0_14] : memref<64x32xf32, #tpu.memory_space<vmem>>, vector<64x32xf32>
      %cst_15 = arith.constant dense<0.000000e+00> : vector<8x32xf32>
      %21 = tpu.matmul %17, %20, %cst_15 {dimension_numbers = #tpu.dot_dimension_numbers<[1], [0], [0], [1], [0, 0, 1, 1], [], []>} : vector<8x64xf32>, vector<64x32xf32>, vector<8x32xf32> -> vector<8x32xf32>
      %22 = arith.addf %19, %21 : vector<8x32xf32>
      %c0_16 = arith.constant 0 : index
      %c0_17 = arith.constant 0 : index
      %23 = vector.load %arg11[%c0_16, %c0_17] : memref<8x32xf32, #tpu.memory_space<vmem>>, vector<8x32xf32>
      tpu.vector_store %arg11[%c0_16, %c0_17], %22 {strides = array<i32>} : memref<8x32xf32, #tpu.memory_space<vmem>>, vector<8x32xf32>,
    } else {
    }
    %c1_i32_4 = arith.constant 1 : i32
    %9 = arith.cmpi eq, %arg1, %c1_i32_4 : i32
    %10 = arith.extui %9 : i1 to i32
    %c0_i32_5 = arith.constant 0 : i32
    %11 = arith.cmpi ne, %10, %c0_i32_5 : i32
    scf.if %11 {
      %c0 = arith.constant 0 : index
      %c0_6 = arith.constant 0 : index
      %12 = vector.load %arg11[%c0, %c0_6] : memref<8x32xf32, #tpu.memory_space<vmem>>, vector<8x32xf32>
      %c0_7 = arith.constant 0 : index
      %c0_8 = arith.constant 0 : index
      %13 = vector.load %arg6[%c0_7, %c0_8] : memref<1x32xf32, #tpu.memory_space<vmem>>, vector<1x32xf32>
      %14 = vector.broadcast %13 : vector<1x32xf32> to vector<8x32xf32>
      %15 = arith.addf %12, %14 : vector<8x32xf32>
      %c0_9 = arith.constant 0 : index
      %c0_10 = arith.constant 0 : index
      %16 = vector.load %arg7[%c0_9, %c0_10] : memref<8x32xf32, #tpu.memory_space<vmem>>, vector<8x32xf32>
      tpu.vector_store %arg7[%c0_9, %c0_10], %15 {strides = array<i32>} : memref<8x32xf32, #tpu.memory_space<vmem>>, vector<8x32xf32>,
    } else {
    }
    return
  }
  func.func @transform_0(%arg0: i32, %arg1: i32) -> (i32, i32) {
    %c0_i32 = arith.constant 0 : i32
    %c0_i32_0 = arith.constant 0 : i32
    return %arg0, %c0_i32 : i32, i32
  }
  func.func @transform_1(%arg0: i32, %arg1: i32) -> (i32, i32) {
    %c0_i32 = arith.constant 0 : i32
    %0 = arith.minsi %arg1, %c0_i32 : i32
    %c0_i32_0 = arith.constant 0 : i32
    %c0_i32_1 = arith.constant 0 : i32
    return %c0_i32_0, %0 : i32, i32
  }
  func.func @transform_2(%arg0: i32, %arg1: i32) -> (i32, i32) {
    %c0_i32 = arith.constant 0 : i32
    %0 = arith.minsi %arg1, %c0_i32 : i32
    %c0_i32_0 = arith.constant 0 : i32
    %c0_i32_1 = arith.constant 0 : i32
    return %c0_i32_0, %0 : i32, i32
  }
  func.func @transform_3(%arg0: i32, %arg1: i32) -> (i32, i32) {
    %c1_i32 = arith.constant 1 : i32
    %0 = arith.subi %arg1, %c1_i32 : i32
    %c0_i32 = arith.constant 0 : i32
    %1 = arith.maxsi %0, %c0_i32 : i32
    %c0_i32_0 = arith.constant 0 : i32
    %c0_i32_1 = arith.constant 0 : i32
    return %1, %c0_i32_0 : i32, i32
  }
  func.func @transform_4(%arg0: i32, %arg1: i32) -> (i32, i32) {
    %c0_i32 = arith.constant 0 : i32
    %c0_i32_0 = arith.constant 0 : i32
    %c0_i32_1 = arith.constant 0 : i32
    return %c0_i32, %c0_i32_0 : i32, i32
  }
  func.func @transform_5(%arg0: i32, %arg1: i32) -> (i32, i32) {
    %c0_i32 = arith.constant 0 : i32
    %c0_i32_0 = arith.constant 0 : i32
    return %arg0, %c0_i32 : i32, i32
  }
  func.func @transform_6(%arg0: i32, %arg1: i32) -> (i32, i32) {
    %c1_i32 = arith.constant 1 : i32
    %0 = arith.subi %arg1, %c1_i32 : i32
    %c0_i32 = arith.constant 0 : i32
    %1 = arith.maxsi %0, %c0_i32 : i32
    %c0_i32_0 = arith.constant 0 : i32
    return %arg0, %1 : i32, i32
  }
}

</mosaic_0001>

<llo_original>
// kernel: tpu_custom_call.1
$region0: #{tpu_custom_call.1}
  #allocation0 [shape = 'u32[]', space=smem, size = 0x4, offset = 0x4, fixed_abs, tag = 'smem constant byte address 0x4 - core index']
  #allocation1 [shape = 'u32[144,128]{1,0:T(1,128)}', space=vmem, size = 0x12000, scoped, tag = 'internal scratch']
  #allocation2 [shape = 'f32[8,64]{1,0:T(8,128)}', space=vmem, size = 0x1000, scoped, tag = 'scratch operand']
  #allocation3 [shape = 'f32[8,1]{1,0:T(8,128)}', space=vmem, size = 0x1000, scoped, tag = 'scratch operand']
  #allocation4 [shape = 'f32[8,32]{1,0:T(8,128)}', space=vmem, size = 0x1000, scoped, tag = 'scratch operand']
  %s0 = inlined_call_operand.vmem [shape: f32[8,32], index: 0, kind: input, shape index: {}]
  %s1 = inlined_call_operand.vmem [shape: f32[32,64], index: 1, kind: input, shape index: {}]
  %s2 = inlined_call_operand.vmem [shape: f32[1,64], index: 2, kind: input, shape index: {}]
  %s3 = inlined_call_operand.vmem [shape: f32[64,32], index: 3, kind: input, shape index: {}]
  %s4 = inlined_call_operand.vmem [shape: f32[1,32], index: 4, kind: input, shape index: {}]
  %s5 = inlined_call_operand.hbm [shape: f32[8,32], index: 5, kind: output, shape index: {0}]
  %s6 = inlined_call_operand.hbm [shape: f32[8,64], index: 6, kind: output, shape index: {1}]
  %7 = xla_tuple %s5, %s6
  %s8 = sld [smem:[#allocation0]]
  $region77: #{tpu_custom_call.1} parent=0
    _
  %s10 = ssub.s32 1, %s8
  %s11 = scalar_select 0, %s10, %s8
  $region1: #{tpu_custom_call.1} parent=0
    #allocation5 [shape = 'u8[4096]{0}', space=vmem, size = 0x1000, scoped, tag = 'output window, operand 0, single buffered']
    #allocation6 [shape = 's32[2]{0}', space=sflag, size = 0x8, scoped, tag = 'scoped memory for tpu_custom_call.1']
    #allocation7 [shape = 'u8[8192]{0}', space=vmem, size = 0x2000, scoped, tag = 'output window, operand 1']
    #allocation8 [shape = 's32[2]{0}', space=sflag, size = 0x8, scoped, tag = 'scoped memory for tpu_custom_call.1']
    %12 = vsyncpa [#allocation6], 0
    %13 = vsyncpa [#allocation8], 0
    %s14 = scalar_lea.sflag [#allocation8], 1
    %15 = vsyncpa %s14, 0
    loop: start=0, step=1, limit=4
    $region2: #{tpu_custom_call.1} parent=1 // loop_pre_header
      _
    $region3: #{tpu_custom_call.1} parent=1 // loop_header
      %s17 = sphi 0, %s21
      %p18 = scmp.ge.s32.totalorder %s17, 4
      %s24 = sphi 0, %s36
      %s25 = sphi 0, %s32
      %s26 = sphi 0, %s24
      %s27 = sphi 0, %s25
      %s28 = sphi 0, %s26
      %s29 = sphi 0, %s27
      %s39 = sphi 0, %s41
      %s42 = sphi 0, %s39
      %s43 = sphi 0, %s42
      %s59 = sphi 0, %s43
      %s69 = sphi 0, %s71
      %s72 = sphi 0, %s69
      %s73 = sphi 0, %s72
      %s89 = sphi 0, %s73
      %s99 = sphi 0, %s101
      %s102 = sphi 0, %s99
      %s103 = sphi 0, %s102
      %s119 = sphi 0, %s103
      %s131 = sphi 0, %s133
      %s134 = sphi 0, %s131
      %s135 = sphi 0, %s134
      %s151 = sphi 0, %s135
      %s155 = sphi 0, %s155
      %s157 = sphi 0, %s155
      %s158 = sphi 0, %s157
      %s172 = sphi 0, %s158
      %s178 = sphi 0, %s180
      %s181 = sphi 0, %s178
      %s182 = sphi 0, %s181
      %s198 = sphi 0, %s182
      %s212 = sphi 0, %s214
      %s215 = sphi 0, %s212
      %s216 = sphi 0, %s215
      %s232 = sphi 0, %s216
    $region4: #{tpu_custom_call.1} parent=1 // loop_header_branch
      %20 = sbr.rel (%p18) target = $region8
    $region5: #{tpu_custom_call.1} parent=1 // loop_body
      %s22 = ssub.s32 %s17, 1
      %s23 = ssub.s32 %s17, 2
      %s30 = sadd.s32 1, %s25
      %p31 = scmp.ge.s32.totalorder %s30, 2
      %s32 = scalar_select %p31, 0, %s30
      %s33 = sadd.s32 1, %s24
      %s34 = scalar_select %p31, %s33, %s24
      %p35 = scmp.ge.s32.totalorder %s34, 1
      %s36 = scalar_select %p35, 0, %s34
      %s37 = ssub.s32 %s24, %s36
      %p38 = scmp.eq.s32.totalorder %s37, 0
      %s40 = sadd.s32 %s39, 1
      %s41 = scalar_select %p38, %s39, %s40
      %p44 = pneg %p38
      %p45 = scmp.eq.s32.totalorder %s17, 1
      %p46 = por %p44, %p45
      %p47 = scmp.ne.s32.totalorder %s39, %s42
      %p48 = scmp.eq.s32.totalorder %s17, 0
      %p49 = por %p47, %p48
      %p50 = scmp.ne.s32.totalorder %s39, %s42
      %p51 = scmp.eq.s32.totalorder %s22, 1
      %p52 = por %p50, %p51
      %p53 = scmp.ne.s32.totalorder %s42, %s43
      %p54 = scmp.eq.s32.totalorder %s22, 0
      %p55 = por %p53, %p54
      %p56 = scmp.ne.s32.totalorder %s42, %s43
      %p57 = scmp.eq.s32.totalorder %s23, 1
      %p58 = por %p56, %p57
      %p60 = scmp.ne.s32.totalorder %s43, %s59
      %p61 = scmp.eq.s32.totalorder %s23, 0
      %p62 = por %p60, %p61
      %p63 = scmp.lt.s32.totalorder %s25, 0
      %s64 = scalar_select %p63, %s25, 0
      %p65 = scmp.lt.s32.totalorder %s32, 0
      %s66 = scalar_select %p65, %s32, 0
      %s67 = ssub.s32 %s64, %s66
      %p68 = scmp.eq.s32.totalorder %s67, 0
      %s70 = sadd.s32 %s69, 1
      %s71 = scalar_select %p68, %s69, %s70
      %p74 = pneg %p68
      %p75 = scmp.eq.s32.totalorder %s17, 1
      %p76 = por %p74, %p75
      %p77 = scmp.ne.s32.totalorder %s69, %s72
      %p78 = scmp.eq.s32.totalorder %s17, 0
      %p79 = por %p77, %p78
      %p80 = scmp.ne.s32.totalorder %s69, %s72
      %p81 = scmp.eq.s32.totalorder %s22, 1
      %p82 = por %p80, %p81
      %p83 = scmp.ne.s32.totalorder %s72, %s73
      %p84 = scmp.eq.s32.totalorder %s22, 0
      %p85 = por %p83, %p84
      %p86 = scmp.ne.s32.totalorder %s72, %s73
      %p87 = scmp.eq.s32.totalorder %s23, 1
      %p88 = por %p86, %p87
      %p90 = scmp.ne.s32.totalorder %s73, %s89
      %p91 = scmp.eq.s32.totalorder %s23, 0
      %p92 = por %p90, %p91
      %p93 = scmp.lt.s32.totalorder %s25, 0
      %s94 = scalar_select %p93, %s25, 0
      %p95 = scmp.lt.s32.totalorder %s32, 0
      %s96 = scalar_select %p95, %s32, 0
      %s97 = ssub.s32 %s94, %s96
      %p98 = scmp.eq.s32.totalorder %s97, 0
      %s100 = sadd.s32 %s99, 1
      %s101 = scalar_select %p98, %s99, %s100
      %p104 = pneg %p98
      %p105 = scmp.eq.s32.totalorder %s17, 1
      %p106 = por %p104, %p105
      %p107 = scmp.ne.s32.totalorder %s99, %s102
      %p108 = scmp.eq.s32.totalorder %s17, 0
      %p109 = por %p107, %p108
      %p110 = scmp.ne.s32.totalorder %s99, %s102
      %p111 = scmp.eq.s32.totalorder %s22, 1
      %p112 = por %p110, %p111
      %p113 = scmp.ne.s32.totalorder %s102, %s103
      %p114 = scmp.eq.s32.totalorder %s22, 0
      %p115 = por %p113, %p114
      %p116 = scmp.ne.s32.totalorder %s102, %s103
      %p117 = scmp.eq.s32.totalorder %s23, 1
      %p118 = por %p116, %p117
      %p120 = scmp.ne.s32.totalorder %s103, %s119
      %p121 = scmp.eq.s32.totalorder %s23, 0
      %p122 = por %p120, %p121
      %s123 = ssub.s32 %s25, 1
      %p124 = scmp.gt.s32.totalorder %s123, 0
      %s125 = scalar_select %p124, %s123, 0
      %s126 = ssub.s32 %s32, 1
      %p127 = scmp.gt.s32.totalorder %s126, 0
      %s128 = scalar_select %p127, %s126, 0
      %s129 = ssub.s32 %s125, %s128
      %p130 = scmp.eq.s32.totalorder %s129, 0
      %s132 = sadd.s32 %s131, 1
      %s133 = scalar_select %p130, %s131, %s132
      %p136 = pneg %p130
      %p137 = scmp.eq.s32.totalorder %s17, 1
      %p138 = por %p136, %p137
      %p139 = scmp.ne.s32.totalorder %s131, %s134
      %p140 = scmp.eq.s32.totalorder %s17, 0
      %p141 = por %p139, %p140
      %p142 = scmp.ne.s32.totalorder %s131, %s134
      %p143 = scmp.eq.s32.totalorder %s22, 1
      %p144 = por %p142, %p143
      %p145 = scmp.ne.s32.totalorder %s134, %s135
      %p146 = scmp.eq.s32.totalorder %s22, 0
      %p147 = por %p145, %p146
      %p148 = scmp.ne.s32.totalorder %s134, %s135
      %p149 = scmp.eq.s32.totalorder %s23, 1
      %p150 = por %p148, %p149
      %p152 = scmp.ne.s32.totalorder %s135, %s151
      %p153 = scmp.eq.s32.totalorder %s23, 0
      %p154 = por %p152, %p153
      %s156 = sadd.s32 %s155, 1
      %p159 = scmp.eq.s32.totalorder %s17, 1
      %p160 = scmp.ne.s32.totalorder %s155, %s157
      %p161 = scmp.eq.s32.totalorder %s17, 0
      %p162 = por %p160, %p161
      %p163 = scmp.ne.s32.totalorder %s155, %s157
      %p164 = scmp.eq.s32.totalorder %s22, 1
      %p165 = por %p163, %p164
      %p166 = scmp.ne.s32.totalorder %s157, %s158
      %p167 = scmp.eq.s32.totalorder %s22, 0
      %p168 = por %p166, %p167
      %p169 = scmp.ne.s32.totalorder %s157, %s158
      %p170 = scmp.eq.s32.totalorder %s23, 1
      %p171 = por %p169, %p170
      %p173 = scmp.ne.s32.totalorder %s158, %s172
      %p174 = scmp.eq.s32.totalorder %s23, 0
      %p175 = por %p173, %p174
      %s176 = ssub.s32 %s24, %s36
      %p177 = scmp.eq.s32.totalorder %s176, 0
      %s179 = sadd.s32 %s178, 1
      %s180 = scalar_select %p177, %s178, %s179
      %p183 = pneg %p177
      %p184 = scmp.eq.s32.totalorder %s17, 1
      %p185 = por %p183, %p184
      %p186 = scmp.ne.s32.totalorder %s178, %s181
      %p187 = scmp.eq.s32.totalorder %s17, 0
      %p188 = por %p186, %p187
      %p189 = scmp.ne.s32.totalorder %s178, %s181
      %p190 = scmp.eq.s32.totalorder %s22, 1
      %p191 = por %p189, %p190
      %p192 = scmp.ne.s32.totalorder %s181, %s182
      %p193 = scmp.eq.s32.totalorder %s22, 0
      %p194 = por %p192, %p193
      %p195 = scmp.ne.s32.totalorder %s181, %s182
      %p196 = scmp.eq.s32.totalorder %s23, 1
      %p197 = por %p195, %p196
      %p199 = scmp.ne.s32.totalorder %s182, %s198
      %p200 = scmp.eq.s32.totalorder %s23, 0
      %p201 = por %p199, %p200
      %s202 = ssub.s32 %s25, 1
      %p203 = scmp.gt.s32.totalorder %s202, 0
      %s204 = scalar_select %p203, %s202, 0
      %s205 = ssub.s32 %s32, 1
      %p206 = scmp.gt.s32.totalorder %s205, 0
      %s207 = scalar_select %p206, %s205, 0
      %s208 = ssub.s32 %s24, %s36
      %s209 = ssub.s32 %s204, %s207
      %s210 = sor.u32 %s208, %s209
      %p211 = scmp.eq.s32.totalorder %s210, 0
      %s213 = sadd.s32 %s212, 1
      %s214 = scalar_select %p211, %s212, %s213
      %p217 = pneg %p211
      %p218 = scmp.eq.s32.totalorder %s17, 1
      %p219 = por %p217, %p218
      %p220 = scmp.ne.s32.totalorder %s212, %s215
      %p221 = scmp.eq.s32.totalorder %s17, 0
      %p222 = por %p220, %p221
      %p223 = scmp.ne.s32.totalorder %s212, %s215
      %p224 = scmp.eq.s32.totalorder %s22, 1
      %p225 = por %p223, %p224
      %p226 = scmp.ne.s32.totalorder %s215, %s216
      %p227 = scmp.eq.s32.totalorder %s22, 0
      %p228 = por %p226, %p227
      %p229 = scmp.ne.s32.totalorder %s215, %s216
      %p230 = scmp.eq.s32.totalorder %s23, 1
      %p231 = por %p229, %p230
      %p233 = scmp.ne.s32.totalorder %s216, %s232
      %p234 = scmp.eq.s32.totalorder %s23, 0
      %p235 = por %p233, %p234
      %p236 = scmp.le.s32.totalorder 1, %s17
      %p237 = scmp.lt.s32.totalorder %s17, 3
      %p238 = pnand %p236, %p237
      %p239 = pneg %p238
      // Predicated region
      $region9: #{tpu_custom_call.1} parent=5 // pred_check
        _
      $region10: #{tpu_custom_call.1} parent=5 // pred_check_branch
        %241 = sbr.rel (%p238) target = $region12
      $region11: #{tpu_custom_call.1} parent=5 // pred_region
        %s242 = ssub.s32 %s17, 1
        // Predicated region
        $region13: #{tpu_custom_call.1} parent=11 // pred_check
          %p243 = pneg %p55
        $region14: #{tpu_custom_call.1} parent=11 // pred_check_branch
          %245 = sbr.rel (%p243) target = $region16
        $region15: #{tpu_custom_call.1} parent=11 // pred_region
          %p246 = scmp.lt.s32.totalorder %s26, 0
          %s247 = scalar_select %p246, %s26, 0
          %s248 = smul.addr %s247, 8
          %s249 = scalar_lea.vmem %s0, %s248
        $region16: #{tpu_custom_call.1} parent=11 // pred_fallthru
          _
        // Predicated region
        $region17: #{tpu_custom_call.1} parent=11 // pred_check
          %p250 = pneg %p168
        $region18: #{tpu_custom_call.1} parent=11 // pred_check_branch
          %252 = sbr.rel (%p250) target = $region20
        $region19: #{tpu_custom_call.1} parent=11 // pred_region
          _
        $region20: #{tpu_custom_call.1} parent=11 // pred_fallthru
          _
      $region12: #{tpu_custom_call.1} parent=5 // pred_fallthru
        _
      %p253 = scmp.lt.s32.totalorder %s17, 2
      // Predicated region
      $region21: #{tpu_custom_call.1} parent=5 // pred_check
        %p254 = pneg %p253
      $region22: #{tpu_custom_call.1} parent=5 // pred_check_branch
        %256 = sbr.rel (%p254) target = $region24
      $region23: #{tpu_custom_call.1} parent=5 // pred_region
        // Predicated region
        $region25: #{tpu_custom_call.1} parent=23 // pred_check
          %p257 = pneg %p79
        $region26: #{tpu_custom_call.1} parent=23 // pred_check_branch
          %259 = sbr.rel (%p257) target = $region28
        $region27: #{tpu_custom_call.1} parent=23 // pred_region
          %p260 = scmp.lt.s32.totalorder %s25, 0
          %s261 = scalar_select %p260, %s25, 0
          %p262 = scmp.lt.s32.totalorder %s261, 0
          %s263 = scalar_select %p262, %s261, 0
          %s264 = smul.addr %s263, 8
          %s265 = scalar_lea.vmem %s1, %s264
          %p266 = scmp.lt.s32.totalorder %s25, 0
          %s267 = scalar_select %p266, %s25, 0
        $region28: #{tpu_custom_call.1} parent=23 // pred_fallthru
          _
        // Predicated region
        $region29: #{tpu_custom_call.1} parent=23 // pred_check
          %p268 = pneg %p109
        $region30: #{tpu_custom_call.1} parent=23 // pred_check_branch
          %270 = sbr.rel (%p268) target = $region32
        $region31: #{tpu_custom_call.1} parent=23 // pred_region
          %p271 = scmp.lt.s32.totalorder %s25, 0
          %s272 = scalar_select %p271, %s25, 0
          %p273 = scmp.lt.s32.totalorder %s272, 0
          %s274 = scalar_select %p273, %s272, 0
          %s275 = scalar_lea.vmem %s2, %s274
          %p276 = scmp.lt.s32.totalorder %s25, 0
          %s277 = scalar_select %p276, %s25, 0
        $region32: #{tpu_custom_call.1} parent=23 // pred_fallthru
          _
        // Predicated region
        $region33: #{tpu_custom_call.1} parent=23 // pred_check
          %p278 = pneg %p141
        $region34: #{tpu_custom_call.1} parent=23 // pred_check_branch
          %280 = sbr.rel (%p278) target = $region36
        $region35: #{tpu_custom_call.1} parent=23 // pred_region
          %s281 = ssub.s32 %s25, 1
          %p282 = scmp.gt.s32.totalorder %s281, 0
          %s283 = scalar_select %p282, %s281, 0
          %s284 = smul.u32 8, %s283
          %p285 = scmp.lt.s32.totalorder %s284, 7
          %s286 = scalar_select %p285, %s284, 7
          %s287 = smul.addr %s286, 8
          %s288 = scalar_lea.vmem %s3, %s287
          %s289 = ssub.s32 %s25, 1
          %p290 = scmp.gt.s32.totalorder %s289, 0
          %s291 = scalar_select %p290, %s289, 0
          %s292 = smul.u32 8, %s291
        $region36: #{tpu_custom_call.1} parent=23 // pred_fallthru
          _
      $region24: #{tpu_custom_call.1} parent=5 // pred_fallthru
        _
      %p293 = scmp.le.s32.totalorder 1, %s17
      %p294 = scmp.lt.s32.totalorder %s17, 3
      %p295 = pnand %p293, %p294
      %p296 = pneg %p295
      // Predicated region
      $region37: #{tpu_custom_call.1} parent=5 // pred_check
        _
      $region38: #{tpu_custom_call.1} parent=5 // pred_check_branch
        %298 = sbr.rel (%p295) target = $region40
      $region39: #{tpu_custom_call.1} parent=5 // pred_region
        %s299 = ssub.s32 %s17, 1
        %p300 = scmp.lt.s32.totalorder %s26, 0
        %s301 = scalar_select %p300, %s26, 0
        %s302 = smul.addr %s301, 8
        %s303 = scalar_lea.vmem %s0, %s302
        %p304 = pneg %p55
        %p305 = pneg %p52
        %p306 = scmp.lt.s32.totalorder %s27, 0
        %s307 = scalar_select %p306, %s27, 0
        %p308 = scmp.lt.s32.totalorder %s307, 0
        %s309 = scalar_select %p308, %s307, 0
        %s310 = smul.addr %s309, 8
        %s311 = scalar_lea.vmem %s1, %s310
        %p312 = pneg %p85
        %p313 = pneg %p82
        %p314 = scmp.lt.s32.totalorder %s27, 0
        %s315 = scalar_select %p314, %s27, 0
        %p316 = scmp.lt.s32.totalorder %s315, 0
        %s317 = scalar_select %p316, %s315, 0
        %s318 = scalar_lea.vmem %s2, %s317
        %p319 = pneg %p115
        %p320 = pneg %p112
        %s321 = ssub.s32 %s27, 1
        %p322 = scmp.gt.s32.totalorder %s321, 0
        %s323 = scalar_select %p322, %s321, 0
        %s324 = smul.u32 8, %s323
        %p325 = scmp.lt.s32.totalorder %s324, 7
        %s326 = scalar_select %p325, %s324, 7
        %s327 = smul.addr %s326, 8
        %s328 = scalar_lea.vmem %s3, %s327
        %p329 = pneg %p147
        %p330 = pneg %p144
        %p331 = pneg %p168
        %p332 = pneg %p165
        %p333 = pneg %p194
        %p334 = pneg %p191
        %p335 = pneg %p228
        %p336 = pneg %p225
        %s337 = sand.u32 %s215, 1
        %s338 = scalar_lea.sflag [#allocation8], %s337
        %s339 = sand.u32 %s215, 1
        %s340 = smul.addr %s339, 8
        %s341 = scalar_lea.vmem [#allocation7], %s340
        %p342 = scmp.lt.s32.totalorder %s26, 0
        %s343 = scalar_select %p342, %s26, 0
        %s344 = smul.addr %s343, 8
        %s345 = scalar_lea.vmem %s0, %s344
        %p346 = scmp.lt.s32.totalorder %s27, 0
        %s347 = scalar_select %p346, %s27, 0
        %p348 = scmp.lt.s32.totalorder %s347, 0
        %s349 = scalar_select %p348, %s347, 0
        %s350 = smul.addr %s349, 8
        %s351 = scalar_lea.vmem %s1, %s350
        %p352 = scmp.lt.s32.totalorder %s27, 0
        %s353 = scalar_select %p352, %s27, 0
        %p354 = scmp.lt.s32.totalorder %s27, 0
        %s355 = scalar_select %p354, %s27, 0
        %p356 = scmp.lt.s32.totalorder %s355, 0
        %s357 = scalar_select %p356, %s355, 0
        %s358 = scalar_lea.vmem %s2, %s357
        %p359 = scmp.lt.s32.totalorder %s27, 0
        %s360 = scalar_select %p359, %s27, 0
        %s361 = ssub.s32 %s27, 1
        %p362 = scmp.gt.s32.totalorder %s361, 0
        %s363 = scalar_select %p362, %s361, 0
        %s364 = smul.u32 8, %s363
        %p365 = scmp.lt.s32.totalorder %s364, 7
        %s366 = scalar_select %p365, %s364, 7
        %s367 = smul.addr %s366, 8
        %s368 = scalar_lea.vmem %s3, %s367
        %s369 = ssub.s32 %s27, 1
        %p370 = scmp.gt.s32.totalorder %s369, 0
        %s371 = scalar_select %p370, %s369, 0
        %s372 = smul.u32 8, %s371
        %s373 = ssub.s32 %s27, 1
        %p374 = scmp.gt.s32.totalorder %s373, 0
        %s375 = scalar_select %p374, %s373, 0
        %p376 = scmp.lt.s32.totalorder %s27, 1
        // Predicated region
        $region41: #{tpu_custom_call.1} parent=39 // pred_check
          %p377 = pneg %p376
        $region42: #{tpu_custom_call.1} parent=39 // pred_check_branch
          %379 = sbr.rel (%p377) target = $region44
        $region43: #{tpu_custom_call.1} parent=39 // pred_region
          %v380 = vld [vmem:[%s345] sm:$0xff]
          %v381 = vld [vmem:[%s351] sm:$0xff]
          %v382 = vld [vmem:[%s351 + $0x8] sm:$0xff]
          %v383 = vld [vmem:[%s351 + $0x10] sm:$0xff]
          %v384 = vld [vmem:[%s351 + $0x18] sm:$0xff]
          %v385 = vld [vmem:[%s358] sm:$0x1]
          %v387 = vlaneseq
          %v388 = vshrl.u32 %v387, 7
          %v389 = vsub.s32 0, %v388
          %v390 = vrot.slane %v385, %v389
          %vm392 = vcmask 261120
          %v394 = vsel %vm392, %v380, 0
          %396 = vmatprep.subr.mxu0 0.0
          %397 = vmatpush1.msra.mxu0 %v381
          %398 = vmatprep.subr.mxu0 0.0
          %399 = vmatpush1.msra.mxu0 %v382
          %400 = vmatprep.subr.mxu0 0.0
          %401 = vmatpush1.msra.mxu0 %v383
          %402 = vmatprep.subr.mxu0 0.0
          %403 = vmatpush1.msra.mxu0 %v384
          %404 = vmatprep.subr.mxu0 0.0
          %405 = vmatpush1.msra.mxu0 0.0
          %406 = vmatprep.subr.mxu0 0.0
          %407 = vmatpush1.msra.mxu0 0.0
          %408 = vmatprep.subr.mxu0 0.0
          %409 = vmatpush1.msra.mxu0 0.0
          %410 = vmatprep.subr.mxu0 0.0
          %411 = vmatpush1.msra.mxu0 0.0
          %412 = vmatprep.subr.mxu0 0.0
          %413 = vmatpush1.msra.mxu0 0.0
          %414 = vmatprep.subr.mxu0 0.0
          %415 = vmatpush1.msra.mxu0 0.0
          %416 = vmatprep.subr.mxu0 0.0
          %417 = vmatpush1.msra.mxu0 0.0
          %418 = vmatprep.subr.mxu0 0.0
          %419 = vmatpush1.msra.mxu0 0.0
          %420 = vmatprep.subr.mxu0 0.0
          %421 = vmatpush1.msra.mxu0 0.0
          %422 = vmatprep.subr.mxu0 0.0
          %423 = vmatpush1.msra.mxu0 0.0
          %424 = vmatprep.subr.mxu0 0.0
          %425 = vmatpush1.msra.mxu0 0.0
          %426 = vmatprep.subr.mxu0 0.0
          %427 = vmatpush1.msra.mxu0 0.0
          %428 = vmatprep.subr.mxu0 0.0
          %429 = vmatpush1.msra.mxu0 0.0
          %430 = vmatprep.subr.mxu0 0.0
          %431 = vmatpush1.msra.mxu0 0.0
          %432 = vmatprep.subr.mxu0 0.0
          %433 = vmatpush1.msra.mxu0 0.0
          %434 = vmatprep.subr.mxu0 0.0
          %435 = vmatpush1.msra.mxu0 0.0
          %436 = vmatprep.subr.mxu0 0.0
          %437 = vmatpush1.msra.mxu0 0.0
          %438 = vmatprep.subr.mxu0 0.0
          %439 = vmatpush1.msra.mxu0 0.0
          %440 = vmatprep.subr.mxu0 0.0
          %441 = vmatpush1.msra.mxu0 0.0
          %442 = vmatprep.subr.mxu0 0.0
          %443 = vmatpush1.msra.mxu0 0.0
          %444 = vmatprep.subr.mxu0 0.0
          %445 = vmatpush1.msra.mxu0 0.0
          %446 = vmatprep.subr.mxu0 0.0
          %447 = vmatpush1.msra.mxu0 0.0
          %448 = vmatprep.subr.mxu0 0.0
          %449 = vmatpush1.msra.mxu0 0.0
          %450 = vmatprep.subr.mxu0 0.0
          %451 = vmatpush1.msra.mxu0 0.0
          %452 = vmatprep.subr.mxu0 0.0
          %453 = vmatpush1.msra.mxu0 0.0
          %454 = vmatprep.subr.mxu0 0.0
          %455 = vmatpush1.msra.mxu0 0.0
          %456 = vmatprep.subr.mxu0 0.0
          %457 = vmatpush1.msra.mxu0 0.0
          %458 = vmatprep.subr.mxu0 0.0
          %459 = vmatpush1.msra.mxu0 0.0
          %460 = vmatprep.mubr.f32.mxu0 0.0
          %461 = vmatmul.mubr.f32.gmra.mrb[0].mxu0 %v394
          %v462 = vpop.f32.mrb[0].mxu0
          %v463 = vadd.f32 %v390, %v462
          %v464 = vpop.f32.mrb[0].mxu0
          %465 = vdwg.mxu0
          %vm466 = vcmask 523264
          %467 = vst.msk [vmem:[#allocation2] sm:$0xff] %vm466, %v463
        $region44: #{tpu_custom_call.1} parent=39 // pred_fallthru
          _
        %p468 = scmp.eq.s32.totalorder %s27, 1
        // Predicated region
        $region45: #{tpu_custom_call.1} parent=39 // pred_check
          %p469 = pneg %p468
        $region46: #{tpu_custom_call.1} parent=39 // pred_check_branch
          %471 = sbr.rel (%p469) target = $region48
        $region47: #{tpu_custom_call.1} parent=39 // pred_region
          %v472 = vld [vmem:[#allocation2] sm:$0xff]
          %v473 = vlaneseq
          %v474 = vand.u32 %v473, 127
          %vm475 = vcmask 523264
          %v476 = vsel %vm475, %v472, -inf
          %477 = vmax.xlane.f32.xlu0 %v476
          %v478 = vpop.xlane.xlu0 %477
          %vm479 = vcmp.eq.f32.partialorder %v472, %v478
          %v480 = vsel %vm479, %v474, 64
          %v481 = vsel %vm475, %v480, 2147483647
          %v482 = vand.u32 %v481, 65535
          %v483 = vshra.s32 %v481, 16
          %v484 = vcvt.s32.f32 %v482
          %v485 = vcvt.s32.f32 %v483
          %486 = vmin.xlane.f32.xlu0 %v485
          %v487 = vpop.xlane.xlu0 %486
          %vm488 = vcmp.eq.f32.partialorder %v485, %v487
          %v489 = vsel %vm488, %v484, inf
          %490 = vmin.xlane.f32.xlu0 %v489
          %v491 = vpop.xlane.xlu0 %490
          %v492 = vcvt.f32.s32 %v491
          %v493 = vcvt.f32.s32 %v487
          %v494 = vshll.u32 %v493, 16
          %v495 = vadd.s32 %v494, %v492
          %vm496 = vcmp.eq.s32.totalorder %v474, %v495
          %v497 = vsel %vm496, -inf, %v472
          %v498 = vsel %vm475, %v497, -inf
          %499 = vmax.xlane.f32.xlu0 %v498
          %v500 = vpop.xlane.xlu0 %499
          %vm501 = vcmp.eq.f32.partialorder %v497, %v500
          %v502 = vsel %vm501, %v474, 64
          %v503 = vsel %vm475, %v502, 2147483647
          %v504 = vand.u32 %v503, 65535
          %v505 = vshra.s32 %v503, 16
          %v506 = vcvt.s32.f32 %v504
          %v507 = vcvt.s32.f32 %v505
          %508 = vmin.xlane.f32.xlu0 %v507
          %v509 = vpop.xlane.xlu0 %508
          %vm510 = vcmp.eq.f32.partialorder %v507, %v509
          %v511 = vsel %vm510, %v506, inf
          %512 = vmin.xlane.f32.xlu0 %v511
          %v513 = vpop.xlane.xlu0 %512
          %v514 = vcvt.f32.s32 %v513
          %v515 = vcvt.f32.s32 %v509
          %v516 = vshll.u32 %v515, 16
          %v517 = vadd.s32 %v516, %v514
          %vm518 = vcmp.eq.s32.totalorder %v474, %v517
          %v519 = vsel %vm518, -inf, %v497
          %v520 = vsel %vm475, %v519, -inf
          %521 = vmax.xlane.f32.xlu0 %v520
          %v522 = vpop.xlane.xlu0 %521
          %vm523 = vcmask 7168
          %524 = vst.msk [vmem:[#allocation3] sm:$0xff] %vm523, %v522
          %vm525 = vcmask 261120
          %526 = vst.msk [vmem:[#allocation4] sm:$0xff] %vm525, 0.0
        $region48: #{tpu_custom_call.1} parent=39 // pred_fallthru
          _
        %p527 = scmp.ge.s32.totalorder %s27, 1
        // Predicated region
        $region49: #{tpu_custom_call.1} parent=39 // pred_check
          %p528 = pneg %p527
        $region50: #{tpu_custom_call.1} parent=39 // pred_check_branch
          %530 = sbr.rel (%p528) target = $region52
        $region51: #{tpu_custom_call.1} parent=39 // pred_region
          %v531 = vld [vmem:[#allocation2] sm:$0xff]
          %v532 = vld [vmem:[#allocation3] sm:$0xff]
          %534 = vset.pattern.permute.xlu0 0
          %535 = vperm.xlu0 %534, %v532
          %v536 = vpop.permute.xlu0 %535
          %v538 = vsub.f32 %v531, %v536
          %v539 = vmax.f32 %v538, 0.0
          %vm540 = vcmask 523264
          %541 = vst.msk [vmem:[%s341] sm:$0xff] %vm540, %v539
          %v542 = vld [vmem:[#allocation4] sm:$0xff]
          %v543 = vld [vmem:[%s368] sm:$0xff]
          %v544 = vld [vmem:[%s368 + $0x8] sm:$0xff]
          %v545 = vld [vmem:[%s368 + $0x10] sm:$0xff]
          %v546 = vld [vmem:[%s368 + $0x18] sm:$0xff]
          %v547 = vld [vmem:[%s368 + $0x20] sm:$0xff]
          %v548 = vld [vmem:[%s368 + $0x28] sm:$0xff]
          %v549 = vld [vmem:[%s368 + $0x30] sm:$0xff]
          %v550 = vld [vmem:[%s368 + $0x38] sm:$0xff]
          %v552 = vsel %vm540, %v539, 0
          %554 = vmatprep.subr.mxu0 0.0
          %555 = vmatpush1.msra.mxu0 %v543
          %556 = vmatprep.subr.mxu0 0.0
          %557 = vmatpush1.msra.mxu0 %v544
          %558 = vmatprep.subr.mxu0 0.0
          %559 = vmatpush1.msra.mxu0 %v545
          %560 = vmatprep.subr.mxu0 0.0
          %561 = vmatpush1.msra.mxu0 %v546
          %562 = vmatprep.subr.mxu0 0.0
          %563 = vmatpush1.msra.mxu0 %v547
          %564 = vmatprep.subr.mxu0 0.0
          %565 = vmatpush1.msra.mxu0 %v548
          %566 = vmatprep.subr.mxu0 0.0
          %567 = vmatpush1.msra.mxu0 %v549
          %568 = vmatprep.subr.mxu0 0.0
          %569 = vmatpush1.msra.mxu0 %v550
          %570 = vmatprep.subr.mxu0 0.0
          %571 = vmatpush1.msra.mxu0 0.0
          %572 = vmatprep.subr.mxu0 0.0
          %573 = vmatpush1.msra.mxu0 0.0
          %574 = vmatprep.subr.mxu0 0.0
          %575 = vmatpush1.msra.mxu0 0.0
          %576 = vmatprep.subr.mxu0 0.0
          %577 = vmatpush1.msra.mxu0 0.0
          %578 = vmatprep.subr.mxu0 0.0
          %579 = vmatpush1.msra.mxu0 0.0
          %580 = vmatprep.subr.mxu0 0.0
          %581 = vmatpush1.msra.mxu0 0.0
          %582 = vmatprep.subr.mxu0 0.0
          %583 = vmatpush1.msra.mxu0 0.0
          %584 = vmatprep.subr.mxu0 0.0
          %585 = vmatpush1.msra.mxu0 0.0
          %586 = vmatprep.subr.mxu0 0.0
          %587 = vmatpush1.msra.mxu0 0.0
          %588 = vmatprep.subr.mxu0 0.0
          %589 = vmatpush1.msra.mxu0 0.0
          %590 = vmatprep.subr.mxu0 0.0
          %591 = vmatpush1.msra.mxu0 0.0
          %592 = vmatprep.subr.mxu0 0.0
          %593 = vmatpush1.msra.mxu0 0.0
          %594 = vmatprep.subr.mxu0 0.0
          %595 = vmatpush1.msra.mxu0 0.0
          %596 = vmatprep.subr.mxu0 0.0
          %597 = vmatpush1.msra.mxu0 0.0
          %598 = vmatprep.subr.mxu0 0.0
          %599 = vmatpush1.msra.mxu0 0.0
          %600 = vmatprep.subr.mxu0 0.0
          %601 = vmatpush1.msra.mxu0 0.0
          %602 = vmatprep.subr.mxu0 0.0
          %603 = vmatpush1.msra.mxu0 0.0
          %604 = vmatprep.subr.mxu0 0.0
          %605 = vmatpush1.msra.mxu0 0.0
          %606 = vmatprep.subr.mxu0 0.0
          %607 = vmatpush1.msra.mxu0 0.0
          %608 = vmatprep.subr.mxu0 0.0
          %609 = vmatpush1.msra.mxu0 0.0
          %610 = vmatprep.subr.mxu0 0.0
          %611 = vmatpush1.msra.mxu0 0.0
          %612 = vmatprep.subr.mxu0 0.0
          %613 = vmatpush1.msra.mxu0 0.0
          %614 = vmatprep.subr.mxu0 0.0
          %615 = vmatpush1.msra.mxu0 0.0
          %616 = vmatprep.subr.mxu0 0.0
          %617 = vmatpush1.msra.mxu0 0.0
          %618 = vmatprep.mubr.f32.mxu0 0.0
          %619 = vmatmul.mubr.f32.gmra.mrb[0].mxu0 %v552
          %v620 = vpop.f32.mrb[0].mxu0
          %v621 = vadd.f32 0.0, %v620
          %v622 = vpop.f32.mrb[0].mxu0
          %623 = vdwg.mxu0
          %v624 = vadd.f32 %v542, %v621
          %vm625 = vcmask 261120
          %626 = vst.msk [vmem:[#allocation4] sm:$0xff] %vm625, %v624
        $region52: #{tpu_custom_call.1} parent=39 // pred_fallthru
          _
        // Predicated region
        $region53: #{tpu_custom_call.1} parent=39 // pred_check
          %p627 = pneg %p468
        $region54: #{tpu_custom_call.1} parent=39 // pred_check_branch
          %629 = sbr.rel (%p627) target = $region56
        $region55: #{tpu_custom_call.1} parent=39 // pred_region
          %v630 = vld [vmem:[#allocation4] sm:$0xff]
          %v631 = vld [vmem:[%s4] sm:$0x1]
          %v633 = vlaneseq
          %v634 = vshrl.u32 %v633, 7
          %v635 = vsub.s32 0, %v634
          %v636 = vrot.slane %v631, %v635
          %v638 = vadd.f32 %v630, %v636
          %vm639 = vcmask 261120
          %640 = vst.msk [vmem:[#allocation5] sm:$0xff] %vm639, %v638
        $region56: #{tpu_custom_call.1} parent=39 // pred_fallthru
          _
        %s641 = sand.u32 %s215, 1
        %s642 = scalar_lea.sflag [#allocation8], %s641
        %s643 = sand.u32 %s215, 1
        %s644 = smul.addr %s643, 8
        %s645 = scalar_lea.vmem [#allocation7], %s644
        // Predicated region
        $region57: #{tpu_custom_call.1} parent=39 // pred_check
          %p646 = pneg %p191
        $region58: #{tpu_custom_call.1} parent=39 // pred_check_branch
          %648 = sbr.rel (%p646) target = $region60
        $region59: #{tpu_custom_call.1} parent=39 // pred_region
          %s650 = ssub.s32 128, 128
          %651 = vsyncadd [#allocation6], %s650
          %s652 = smul.addr %s26, 128
          %s653 = scalar_lea.hbm %s5, %s652
          %s655 = sshll.u32 [#allocation5], 4
          %s656 = int_to_ptr.vmem [resolvable:$true] %s655
          %658 = dma.vmem_to_hbm [thread:$0]  %s656, 128, %s653, [#allocation6]
        $region60: #{tpu_custom_call.1} parent=39 // pred_fallthru
          _
        // Predicated region
        $region61: #{tpu_custom_call.1} parent=39 // pred_check
          %p659 = pneg %p225
        $region62: #{tpu_custom_call.1} parent=39 // pred_check_branch
          %661 = sbr.rel (%p659) target = $region64
        $region63: #{tpu_custom_call.1} parent=39 // pred_region
          %s662 = ssub.s32 %s27, 1
          %p663 = scmp.gt.s32.totalorder %s662, 0
          %s664 = scalar_select %p663, %s662, 0
          %s666 = ssub.s32 128, 128
          %667 = vsyncadd %s642, %s666
          %s668 = sadd.s32 %s664, %s26
          %s669 = smul.addr %s668, 128
          %s670 = scalar_lea.hbm %s6, %s669
          %s672 = sshll.u32 %s645, 4
          %s673 = int_to_ptr.vmem [resolvable:$true] %s672
          %675 = dma.vmem_to_hbm [thread:$0]  %s673, 128, %s670, %s642
        $region64: #{tpu_custom_call.1} parent=39 // pred_fallthru
          _
        // Predicated region
        $region65: #{tpu_custom_call.1} parent=39 // pred_check
          %p676 = pneg %p191
        $region66: #{tpu_custom_call.1} parent=39 // pred_check_branch
          %678 = sbr.rel (%p676) target = $region68
        $region67: #{tpu_custom_call.1} parent=39 // pred_region
          %679 = dma.done [#allocation6], 128
        $region68: #{tpu_custom_call.1} parent=39 // pred_fallthru
          _
      $region40: #{tpu_custom_call.1} parent=5 // pred_fallthru
        _
      %p680 = scmp.le.s32.totalorder 2, %s17
      // Predicated region
      $region69: #{tpu_custom_call.1} parent=5 // pred_check
        %p681 = pneg %p680
      $region70: #{tpu_custom_call.1} parent=5 // pred_check_branch
        %683 = sbr.rel (%p681) target = $region72
      $region71: #{tpu_custom_call.1} parent=5 // pred_region
        %s684 = ssub.s32 %s17, 2
        // Predicated region
        $region73: #{tpu_custom_call.1} parent=71 // pred_check
          %p685 = pneg %p231
        $region74: #{tpu_custom_call.1} parent=71 // pred_check_branch
          %687 = sbr.rel (%p685) target = $region76
        $region75: #{tpu_custom_call.1} parent=71 // pred_region
          %s688 = sand.u32 %s216, 1
          %s689 = scalar_lea.sflag [#allocation8], %s688
          %s690 = sand.u32 %s216, 1
          %s691 = smul.addr %s690, 8
          %s692 = scalar_lea.vmem [#allocation7], %s691
          %693 = dma.done %s689, 128
        $region76: #{tpu_custom_call.1} parent=71 // pred_fallthru
          _
      $region72: #{tpu_custom_call.1} parent=5 // pred_fallthru
        _
    $region6: #{tpu_custom_call.1} parent=1 // loop_footer
      %s21 = sadd.s32 1, %s17
    $region7: #{tpu_custom_call.1} parent=1 // loop_footer_branch
      %16 = sbr.rel target = $region3
    $region8: #{tpu_custom_call.1} parent=1 // loop_exit
      _
    %694 = vsyncpa [#allocation6], 1
    %s695 = scalar_lea.sflag [#allocation6], 1
    %696 = vsyncpa %s695, 1
    %697 = vsyncpa [#allocation8], 1
    %s698 = scalar_lea.sflag [#allocation8], 1
    %699 = vsyncpa %s698, 1

</llo_original>
